<compile_context>
chip_gen: v5e
topology: v5e:2x2
jax: 0.10.0
libtpu: 0.0.40
codegen_flags: <defaults>
</compile_context>

<pallas_src>
import functools

import jax
import jax.numpy as jnp
from jax.experimental import pallas as pl
from jax.experimental.pallas import tpu as pltpu


def _round_up(x, m):
    return ((x + m - 1) // m) * m


def _pick_tiling(N, Ho, Wo):
    """nb = largest divisor of N with output lane width ~128..1024, preferring
    >=2 grid steps (v7x 2-TC sharding); g = images per pool group (>=128 lanes)."""
    divs = [d for d in range(1, N + 1) if N % d == 0]

    def nb_score(d):
        qb = d * Ho * Wo
        return (qb >= 128, qb <= 1024, (N // d) >= 2, qb)

    nb = max(divs, key=nb_score)
    g = next((d for d in range(1, nb + 1) if nb % d == 0 and d * Ho * Wo >= 128),
             nb)
    return nb, g


def _dablock_kernel(x_ref, w1_ref, b1_ref, w2_ref, b2_ref, m_ref, s_ref, o_ref,
                    *, W, group_l, group_q, n_groups):
    # x_ref : (Cin_p, Lb)       Lb = nb*H*W, images flattened onto lanes
    # w1_ref: (C1_p, 9*Cin_p)   fused 3x3 weights, K index = (ky*3+kx)*Cin_p + c
    # b1_ref: (C1_p, 1) f32
    # w2_ref: (C2, 9*C1_p)
    # b2_ref: (C2, 1) f32
    # m_ref : (9, Lb)           hoisted {0,1} boundary masks per 3x3 tap
    # s_ref : (group_l, group_q) shared per-group pool-compaction matrix
    # o_ref : (C2, nb*Ho*Wo) f32 pooled output, lane-dense
    Lb = x_ref.shape[1]
    masks = m_ref[...]                                  # (9, Lb)

    def shift(a, d):
        # out[:, p] = a[:, (p + d) % Lb]; wrapped lanes are zeroed by `masks`
        # for the conv taps and never selected by s_ref for the pooling.
        return pltpu.roll(a, (-d) % Lb, axis=1)

    def conv3x3_relu(inp, w_ref, b_ref):
        taps, k = [], 0
        for dy in (-1, 0, 1):
            for dx in (-1, 0, 1):
                d = dy * W + dx
                tap = inp if d == 0 else shift(inp, d) * masks[k:k + 1, :]
                taps.append(tap)
                k += 1
        patches = jnp.concatenate(taps, axis=0)          # (9*C_in_p, Lb)
        acc = jnp.dot(w_ref[...], patches,
                      preferred_element_type=jnp.float32)  # (C_out, Lb) f32
        return jnp.maximum(acc + b_ref[...], 0.0).astype(inp.dtype)

    y1 = conv3x3_relu(x_ref[...], w1_ref, b1_ref)        # (C1_p, Lb)
    y2 = conv3x3_relu(y1, w2_ref, b2_ref)                 # (C2, Lb)

    # maxpool 2x2 stride 2: pairwise max along j (shift 1) and i (shift W),
    # then block-diagonal compaction: one shared selection matmul per group.
    h = jnp.maximum(y2, shift(y2, 1))
    v = jnp.maximum(h, shift(h, W))
    sel = s_ref[...]
    for c in range(n_groups):
        vc = v[:, c * group_l:(c + 1) * group_l]          # (C2, g*H*W)
        pooled = jnp.dot(vc, sel, preferred_element_type=jnp.float32)
        o_ref[:, c * group_q:(c + 1) * group_q] = pooled.astype(o_ref.dtype)


def dablock_forward(x_nchw, w1, b1, w2, b2, *, compute_dtype=jnp.float32):
    """conv3x3(pad1) -> ReLU -> conv3x3(pad1) -> ReLU -> maxpool(2,2).

    x_nchw: (N, Cin, H, W), w1: (C1, Cin, 3, 3), b1: (C1,),
    w2: (C2, C1, 3, 3), b2: (C2,)  ->  (N, C2, H//2, W//2)
    """
    N, Cin, H, W = x_nchw.shape
    C1 = w1.shape[0]
    C2 = w2.shape[0]
    assert w2.shape[1] == C1, "inc2 must equal outc1"
    assert H % 2 == 0 and W % 2 == 0, "maxpool 2x2 assumes even spatial dims"
    Ho, Wo = H // 2, W // 2
    HW = H * W

    nb, g = _pick_tiling(N, Ho, Wo)
    Lb = nb * HW                        # lanes per grid step
    Qb = nb * Ho * Wo                   # output lanes per grid step
    group_l = g * HW                    # lanes per pool group
    group_q = g * Ho * Wo               # output lanes per pool group (>=128)
    n_groups = nb // g

    cdt = compute_dtype
    f32 = jnp.float32
    Cin_p = _round_up(Cin, 8)           # sublane-align conv1 patch taps
    C1_p = _round_up(C1, 8)             # sublane-align conv2 patch taps

    # NCHW -> channel-major (Cin_p, N*H*W); pad channels with zero rows.
    x_cm = jnp.transpose(x_nchw.astype(cdt), (1, 0, 2, 3)).reshape(Cin, N * HW)
    x_flat = jnp.pad(x_cm, ((0, Cin_p - Cin), (0, 0)))
    # OIHW -> (Cout, 9*Cin_p), K ordered (ky, kx, cin) to match patch stacking.
    w1_p = jnp.pad(w1.astype(cdt),
                   ((0, C1_p - C1), (0, Cin_p - Cin), (0, 0), (0, 0)))
    w2_p = jnp.pad(w2.astype(cdt), ((0, 0), (0, C1_p - C1), (0, 0), (0, 0)))
    w1_mat = jnp.transpose(w1_p, (0, 2, 3, 1)).reshape(C1_p, 9 * Cin_p)
    w2_mat = jnp.transpose(w2_p, (0, 2, 3, 1)).reshape(C2, 9 * C1_p)
    b1_col = jnp.pad(b1.astype(f32), (0, C1_p - C1)).reshape(C1_p, 1)
    b2_col = b2.astype(f32).reshape(C2, 1)

    # Hoisted 3x3 boundary masks (identical for every image / grid step).
    lane = jnp.arange(Lb)
    row = (lane % HW) // W
    col = lane % W
    mask_rows = []
    for dy in (-1, 0, 1):
        for dx in (-1, 0, 1):
            ok = ((row + dy >= 0) & (row + dy < H) &
                  (col + dx >= 0) & (col + dx < W))
            mask_rows.append(ok)
    mask = jnp.stack(mask_rows, axis=0).astype(cdt)       # (9, Lb)

    # Shared per-group pool compaction: column q=(n, io, jo) selects lane
    # p = n*H*W + 2*io*W + 2*jo within the group.  Constant block index ->
    # DMA'd once per kernel call; size is independent of nb.
    q = jnp.arange(group_q)
    qn, qr = q // (Ho * Wo), q % (Ho * Wo)
    p_of_q = qn * HW + (qr // Wo) * 2 * W + (qr % Wo) * 2
    sel = (jnp.arange(group_l)[:, None] == p_of_q[None, :]).astype(cdt)

    kernel = functools.partial(_dablock_kernel, W=W, group_l=group_l,
                               group_q=group_q, n_groups=n_groups)

    out_flat = pl.pallas_call(
        kernel,
        out_shape=jax.ShapeDtypeStruct((C2, N * Ho * Wo), f32),
        grid_spec=pltpu.PrefetchScalarGridSpec(
            num_scalar_prefetch=0,
            grid=(N // nb,),
            in_specs=[
                pl.BlockSpec((Cin_p, Lb), lambda n: (0, n)),
                # Constant-index blocks below are fetched only once by the
                # pipeline; their footprint is small, so no Buffered(1) needed.
                pl.BlockSpec((C1_p, 9 * Cin_p), lambda n: (0, 0)),
                pl.BlockSpec((C1_p, 1), lambda n: (0, 0)),
                pl.BlockSpec((C2, 9 * C1_p), lambda n: (0, 0)),
                pl.BlockSpec((C2, 1), lambda n: (0, 0)),
                pl.BlockSpec((9, Lb), lambda n: (0, 0)),
                pl.BlockSpec((group_l, group_q), lambda n: (0, 0)),
            ],
            out_specs=pl.BlockSpec((C2, Qb), lambda n: (0, n)),
        ),
        compiler_params=pltpu.CompilerParams(
            dimension_semantics=("parallel",)),
    )(x_flat, w1_mat, b1_col, w2_mat, b2_col, mask, sel)

    # (C2, N*Ho*Wo) -> (N, C2, Ho, Wo)
    return jnp.transpose(out_flat.reshape(C2, N, Ho, Wo), (1, 0, 2, 3))


def _reference_forward(x_nchw, w1, b1, w2, b2):
    """Pure-JAX reference (lax conv) matching PyTorch semantics."""
    dn = jax.lax.conv_dimension_numbers(x_nchw.shape, w1.shape,
                                        ("NCHW", "OIHW", "NCHW"))
    y = jax.lax.conv_general_dilated(x_nchw, w1, (1, 1), ((1, 1), (1, 1)),
                                     dimension_numbers=dn)
    y = jnp.maximum(y + b1[None, :, None, None], 0.0)
    dn2 = jax.lax.conv_dimension_numbers(y.shape, w2.shape,
                                         ("NCHW", "OIHW", "NCHW"))
    y = jax.lax.conv_general_dilated(y, w2, (1, 1), ((1, 1), (1, 1)),
                                     dimension_numbers=dn2)
    y = jnp.maximum(y + b2[None, :, None, None], 0.0)
    N, C, H, W = y.shape
    y = y.reshape(N, C, H // 2, 2, W // 2, 2)
    return jnp.max(y, axis=(3, 5))


if __name__ == "__main__":
    # DaBlock(inc1=4, outc1=8, inc2=8, outc2=8)
    inc1, outc1, inc2, outc2 = 4, 8, 8, 8
    N, H, W = 2, 16, 16

    key = jax.random.PRNGKey(0)
    kx, k1, kb1, k2, kb2 = jax.random.split(key, 5)

    x = jax.random.normal(kx, (N, inc1, H, W), dtype=jnp.float32)
    fan1 = inc1 * 9
    fan2 = inc2 * 9
    w1 = jax.random.uniform(k1, (outc1, inc1, 3, 3), jnp.float32,
                            minval=-1.0, maxval=1.0) / jnp.sqrt(fan1)
    b1 = jax.random.uniform(kb1, (outc1,), jnp.float32,
                            minval=-1.0, maxval=1.0) / jnp.sqrt(fan1)
    w2 = jax.random.uniform(k2, (outc2, inc2, 3, 3), jnp.float32,
                            minval=-1.0, maxval=1.0) / jnp.sqrt(fan2)
    b2 = jax.random.uniform(kb2, (outc2,), jnp.float32,
                            minval=-1.0, maxval=1.0) / jnp.sqrt(fan2)

    out = jax.block_until_ready(dablock_forward(x, w1, b1, w2, b2))
    ref = jax.block_until_ready(_reference_forward(x, w1, b1, w2, b2))

    assert out.shape == (N, outc2, H // 2, W // 2), out.shape
    assert jnp.allclose(out, ref, rtol=1e-4, atol=1e-4), \
        float(jnp.max(jnp.abs(out - ref)))
    print("KERNEL_OK")
</pallas_src>

<mosaic_0001>
module attributes {stable_mosaic.version = 11 : i64} {
  func.func @_dablock_kernel(%arg0: i32, %arg1: memref<8x512xf32, #tpu.memory_space<vmem>>, %arg2: memref<8x72xf32, #tpu.memory_space<vmem>>, %arg3: memref<8x1xf32, #tpu.memory_space<vmem>>, %arg4: memref<8x72xf32, #tpu.memory_space<vmem>>, %arg5: memref<8x1xf32, #tpu.memory_space<vmem>>, %arg6: memref<9x512xf32, #tpu.memory_space<vmem>>, %arg7: memref<512x128xf32, #tpu.memory_space<vmem>>, %arg8: memref<8x128xf32, #tpu.memory_space<vmem>>) attributes {dimension_semantics = [#tpu.dimension_semantics<parallel>], iteration_bounds = array<i64: 1>, scalar_prefetch = 0 : i64, scratch_operands = 0 : i64, tpu.core_type = #tpu.core_type<tc>, window_params = [{transform_indices = @transform_0, window_bounds = array<i64: 8, 512>}, {pipeline_mode = #tpu.pipeline_mode<synchronous>, transform_indices = @transform_1, window_bounds = array<i64: 8, 72>}, {pipeline_mode = #tpu.pipeline_mode<synchronous>, transform_indices = @transform_2, window_bounds = array<i64: 8, 1>}, {pipeline_mode = #tpu.pipeline_mode<synchronous>, transform_indices = @transform_3, window_bounds = array<i64: 8, 72>}, {pipeline_mode = #tpu.pipeline_mode<synchronous>, transform_indices = @transform_4, window_bounds = array<i64: 8, 1>}, {pipeline_mode = #tpu.pipeline_mode<synchronous>, transform_indices = @transform_5, window_bounds = array<i64: 9, 512>}, {pipeline_mode = #tpu.pipeline_mode<synchronous>, transform_indices = @transform_6, window_bounds = array<i64: 512, 128>}, {transform_indices = @transform_7, window_bounds = array<i64: 8, 128>}]} {
    %c0 = arith.constant 0 : index
    %c0_0 = arith.constant 0 : index
    %0 = vector.load %arg6[%c0, %c0_0] : memref<9x512xf32, #tpu.memory_space<vmem>>, vector<9x512xf32>
    %c0_1 = arith.constant 0 : index
    %c0_2 = arith.constant 0 : index
    %1 = vector.load %arg1[%c0_1, %c0_2] : memref<8x512xf32, #tpu.memory_space<vmem>>, vector<8x512xf32>
    %c17_i32 = arith.constant 17 : i32
    %2 = tpu.dynamic_rotate %1 by %c17_i32 dim 1 : vector<8x512xf32>, i32 -> vector<8x512xf32>
    %3 = vector.extract_strided_slice %0 {offsets = [0, 0], sizes = [1, 512], strides = [1, 1]} : vector<9x512xf32> to vector<1x512xf32>
    %4 = vector.broadcast %3 : vector<1x512xf32> to vector<8x512xf32>
    %5 = arith.mulf %2, %4 : vector<8x512xf32>
    %c16_i32 = arith.constant 16 : i32
    %6 = tpu.dynamic_rotate %1 by %c16_i32 dim 1 : vector<8x512xf32>, i32 -> vector<8x512xf32>
    %7 = vector.extract_strided_slice %0 {offsets = [1, 0], sizes = [1, 512], strides = [1, 1]} : vector<9x512xf32> to vector<1x512xf32>
    %8 = vector.broadcast %7 : vector<1x512xf32> to vector<8x512xf32>
    %9 = arith.mulf %6, %8 : vector<8x512xf32>
    %c15_i32 = arith.constant 15 : i32
    %10 = tpu.dynamic_rotate %1 by %c15_i32 dim 1 : vector<8x512xf32>, i32 -> vector<8x512xf32>
    %11 = vector.extract_strided_slice %0 {offsets = [2, 0], sizes = [1, 512], strides = [1, 1]} : vector<9x512xf32> to vector<1x512xf32>
    %12 = vector.broadcast %11 : vector<1x512xf32> to vector<8x512xf32>
    %13 = arith.mulf %10, %12 : vector<8x512xf32>
    %c1_i32 = arith.constant 1 : i32
    %14 = tpu.dynamic_rotate %1 by %c1_i32 dim 1 : vector<8x512xf32>, i32 -> vector<8x512xf32>
    %15 = vector.extract_strided_slice %0 {offsets = [3, 0], sizes = [1, 512], strides = [1, 1]} : vector<9x512xf32> to vector<1x512xf32>
    %16 = vector.broadcast %15 : vector<1x512xf32> to vector<8x512xf32>
    %17 = arith.mulf %14, %16 : vector<8x512xf32>
    %c511_i32 = arith.constant 511 : i32
    %18 = tpu.dynamic_rotate %1 by %c511_i32 dim 1 : vector<8x512xf32>, i32 -> vector<8x512xf32>
    %19 = vector.extract_strided_slice %0 {offsets = [5, 0], sizes = [1, 512], strides = [1, 1]} : vector<9x512xf32> to vector<1x512xf32>
    %20 = vector.broadcast %19 : vector<1x512xf32> to vector<8x512xf32>
    %21 = arith.mulf %18, %20 : vector<8x512xf32>
    %c497_i32 = arith.constant 497 : i32
    %22 = tpu.dynamic_rotate %1 by %c497_i32 dim 1 : vector<8x512xf32>, i32 -> vector<8x512xf32>
    %23 = vector.extract_strided_slice %0 {offsets = [6, 0], sizes = [1, 512], strides = [1, 1]} : vector<9x512xf32> to vector<1x512xf32>
    %24 = vector.broadcast %23 : vector<1x512xf32> to vector<8x512xf32>
    %25 = arith.mulf %22, %24 : vector<8x512xf32>
    %c496_i32 = arith.constant 496 : i32
    %26 = tpu.dynamic_rotate %1 by %c496_i32 dim 1 : vector<8x512xf32>, i32 -> vector<8x512xf32>
    %27 = vector.extract_strided_slice %0 {offsets = [7, 0], sizes = [1, 512], strides = [1, 1]} : vector<9x512xf32> to vector<1x512xf32>
    %28 = vector.broadcast %27 : vector<1x512xf32> to vector<8x512xf32>
    %29 = arith.mulf %26, %28 : vector<8x512xf32>
    %c495_i32 = arith.constant 495 : i32
    %30 = tpu.dynamic_rotate %1 by %c495_i32 dim 1 : vector<8x512xf32>, i32 -> vector<8x512xf32>
    %31 = vector.extract_strided_slice %0 {offsets = [8, 0], sizes = [1, 512], strides = [1, 1]} : vector<9x512xf32> to vector<1x512xf32>
    %32 = vector.broadcast %31 : vector<1x512xf32> to vector<8x512xf32>
    %33 = arith.mulf %30, %32 : vector<8x512xf32>
    %34 = tpu.concatenate %5, %9, %13, %17, %1, %21, %25, %29, %33 in 0 : vector<8x512xf32>, vector<8x512xf32>, vector<8x512xf32>, vector<8x512xf32>, vector<8x512xf32>, vector<8x512xf32>, vector<8x512xf32>, vector<8x512xf32>, vector<8x512xf32> -> vector<72x512xf32>
    %c0_3 = arith.constant 0 : index
    %c0_4 = arith.constant 0 : index
    %35 = vector.load %arg2[%c0_3, %c0_4] : memref<8x72xf32, #tpu.memory_space<vmem>>, vector<8x72xf32>
    %cst = arith.constant dense<0.000000e+00> : vector<8x512xf32>
    %36 = tpu.matmul %35, %34, %cst {dimension_numbers = #tpu.dot_dimension_numbers<[1], [0], [0], [1], [0, 0, 1, 1], [], []>} : vector<8x72xf32>, vector<72x512xf32>, vector<8x512xf32> -> vector<8x512xf32>
    %c0_5 = arith.constant 0 : index
    %c0_6 = arith.constant 0 : index
    %37 = vector.load %arg3[%c0_5, %c0_6] : memref<8x1xf32, #tpu.memory_space<vmem>>, vector<8x1xf32>
    %38 = vector.broadcast %37 : vector<8x1xf32> to vector<8x512xf32>
    %39 = arith.addf %36, %38 : vector<8x512xf32>
    %cst_7 = arith.constant 0.000000e+00 : f32
    %40 = vector.broadcast %cst_7 : f32 to vector<8x512xf32>
    %41 = arith.maximumf %39, %40 : vector<8x512xf32>
    %c17_i32_8 = arith.constant 17 : i32
    %42 = tpu.dynamic_rotate %41 by %c17_i32_8 dim 1 : vector<8x512xf32>, i32 -> vector<8x512xf32>
    %43 = vector.extract_strided_slice %0 {offsets = [0, 0], sizes = [1, 512], strides = [1, 1]} : vector<9x512xf32> to vector<1x512xf32>
    %44 = vector.broadcast %43 : vector<1x512xf32> to vector<8x512xf32>
    %45 = arith.mulf %42, %44 : vector<8x512xf32>
    %c16_i32_9 = arith.constant 16 : i32
    %46 = tpu.dynamic_rotate %41 by %c16_i32_9 dim 1 : vector<8x512xf32>, i32 -> vector<8x512xf32>
    %47 = vector.extract_strided_slice %0 {offsets = [1, 0], sizes = [1, 512], strides = [1, 1]} : vector<9x512xf32> to vector<1x512xf32>
    %48 = vector.broadcast %47 : vector<1x512xf32> to vector<8x512xf32>
    %49 = arith.mulf %46, %48 : vector<8x512xf32>
    %c15_i32_10 = arith.constant 15 : i32
    %50 = tpu.dynamic_rotate %41 by %c15_i32_10 dim 1 : vector<8x512xf32>, i32 -> vector<8x512xf32>
    %51 = vector.extract_strided_slice %0 {offsets = [2, 0], sizes = [1, 512], strides = [1, 1]} : vector<9x512xf32> to vector<1x512xf32>
    %52 = vector.broadcast %51 : vector<1x512xf32> to vector<8x512xf32>
    %53 = arith.mulf %50, %52 : vector<8x512xf32>
    %c1_i32_11 = arith.constant 1 : i32
    %54 = tpu.dynamic_rotate %41 by %c1_i32_11 dim 1 : vector<8x512xf32>, i32 -> vector<8x512xf32>
    %55 = vector.extract_strided_slice %0 {offsets = [3, 0], sizes = [1, 512], strides = [1, 1]} : vector<9x512xf32> to vector<1x512xf32>
    %56 = vector.broadcast %55 : vector<1x512xf32> to vector<8x512xf32>
    %57 = arith.mulf %54, %56 : vector<8x512xf32>
    %c511_i32_12 = arith.constant 511 : i32
    %58 = tpu.dynamic_rotate %41 by %c511_i32_12 dim 1 : vector<8x512xf32>, i32 -> vector<8x512xf32>
    %59 = vector.extract_strided_slice %0 {offsets = [5, 0], sizes = [1, 512], strides = [1, 1]} : vector<9x512xf32> to vector<1x512xf32>
    %60 = vector.broadcast %59 : vector<1x512xf32> to vector<8x512xf32>
    %61 = arith.mulf %58, %60 : vector<8x512xf32>
    %c497_i32_13 = arith.constant 497 : i32
    %62 = tpu.dynamic_rotate %41 by %c497_i32_13 dim 1 : vector<8x512xf32>, i32 -> vector<8x512xf32>
    %63 = vector.extract_strided_slice %0 {offsets = [6, 0], sizes = [1, 512], strides = [1, 1]} : vector<9x512xf32> to vector<1x512xf32>
    %64 = vector.broadcast %63 : vector<1x512xf32> to vector<8x512xf32>
    %65 = arith.mulf %62, %64 : vector<8x512xf32>
    %c496_i32_14 = arith.constant 496 : i32
    %66 = tpu.dynamic_rotate %41 by %c496_i32_14 dim 1 : vector<8x512xf32>, i32 -> vector<8x512xf32>
    %67 = vector.extract_strided_slice %0 {offsets = [7, 0], sizes = [1, 512], strides = [1, 1]} : vector<9x512xf32> to vector<1x512xf32>
    %68 = vector.broadcast %67 : vector<1x512xf32> to vector<8x512xf32>
    %69 = arith.mulf %66, %68 : vector<8x512xf32>
    %c495_i32_15 = arith.constant 495 : i32
    %70 = tpu.dynamic_rotate %41 by %c495_i32_15 dim 1 : vector<8x512xf32>, i32 -> vector<8x512xf32>
    %71 = vector.extract_strided_slice %0 {offsets = [8, 0], sizes = [1, 512], strides = [1, 1]} : vector<9x512xf32> to vector<1x512xf32>
    %72 = vector.broadcast %71 : vector<1x512xf32> to vector<8x512xf32>
    %73 = arith.mulf %70, %72 : vector<8x512xf32>
    %74 = tpu.concatenate %45, %49, %53, %57, %41, %61, %65, %69, %73 in 0 : vector<8x512xf32>, vector<8x512xf32>, vector<8x512xf32>, vector<8x512xf32>, vector<8x512xf32>, vector<8x512xf32>, vector<8x512xf32>, vector<8x512xf32>, vector<8x512xf32> -> vector<72x512xf32>
    %c0_16 = arith.constant 0 : index
    %c0_17 = arith.constant 0 : index
    %75 = vector.load %arg4[%c0_16, %c0_17] : memref<8x72xf32, #tpu.memory_space<vmem>>, vector<8x72xf32>
    %cst_18 = arith.constant dense<0.000000e+00> : vector<8x512xf32>
    %76 = tpu.matmul %75, %74, %cst_18 {dimension_numbers = #tpu.dot_dimension_numbers<[1], [0], [0], [1], [0, 0, 1, 1], [], []>} : vector<8x72xf32>, vector<72x512xf32>, vector<8x512xf32> -> vector<8x512xf32>
    %c0_19 = arith.constant 0 : index
    %c0_20 = arith.constant 0 : index
    %77 = vector.load %arg5[%c0_19, %c0_20] : memref<8x1xf32, #tpu.memory_space<vmem>>, vector<8x1xf32>
    %78 = vector.broadcast %77 : vector<8x1xf32> to vector<8x512xf32>
    %79 = arith.addf %76, %78 : vector<8x512xf32>
    %cst_21 = arith.constant 0.000000e+00 : f32
    %80 = vector.broadcast %cst_21 : f32 to vector<8x512xf32>
    %81 = arith.maximumf %79, %80 : vector<8x512xf32>
    %c511_i32_22 = arith.constant 511 : i32
    %82 = tpu.dynamic_rotate %81 by %c511_i32_22 dim 1 : vector<8x512xf32>, i32 -> vector<8x512xf32>
    %83 = arith.maximumf %81, %82 : vector<8x512xf32>
    %c496_i32_23 = arith.constant 496 : i32
    %84 = tpu.dynamic_rotate %83 by %c496_i32_23 dim 1 : vector<8x512xf32>, i32 -> vector<8x512xf32>
    %85 = arith.maximumf %83, %84 : vector<8x512xf32>
    %c0_24 = arith.constant 0 : index
    %c0_25 = arith.constant 0 : index
    %86 = vector.load %arg7[%c0_24, %c0_25] : memref<512x128xf32, #tpu.memory_space<vmem>>, vector<512x128xf32>
    %cst_26 = arith.constant dense<0.000000e+00> : vector<8x128xf32>
    %87 = tpu.matmul %85, %86, %cst_26 {dimension_numbers = #tpu.dot_dimension_numbers<[1], [0], [0], [1], [0, 0, 1, 1], [], []>} : vector<8x512xf32>, vector<512x128xf32>, vector<8x128xf32> -> vector<8x128xf32>
    %c0_27 = arith.constant 0 : index
    %c0_28 = arith.constant 0 : index
    %88 = vector.load %arg8[%c0_27, %c0_28] : memref<8x128xf32, #tpu.memory_space<vmem>>, vector<8x128xf32>
    tpu.vector_store %arg8[%c0_27, %c0_28], %87 {strides = array<i32>} : memref<8x128xf32, #tpu.memory_space<vmem>>, vector<8x128xf32>,
    return
  }
  func.func @transform_0(%arg0: i32) -> (i32, i32) {
    %c0_i32 = arith.constant 0 : i32
    %c0_i32_0 = arith.constant 0 : i32
    return %c0_i32, %arg0 : i32, i32
  }
  func.func @transform_1(%arg0: i32) -> (i32, i32) {
    %c0_i32 = arith.constant 0 : i32
    %c0_i32_0 = arith.constant 0 : i32
    %c0_i32_1 = arith.constant 0 : i32
    return %c0_i32, %c0_i32_0 : i32, i32
  }
  func.func @transform_2(%arg0: i32) -> (i32, i32) {
    %c0_i32 = arith.constant 0 : i32
    %c0_i32_0 = arith.constant 0 : i32
    %c0_i32_1 = arith.constant 0 : i32
    return %c0_i32, %c0_i32_0 : i32, i32
  }
  func.func @transform_3(%arg0: i32) -> (i32, i32) {
    %c0_i32 = arith.constant 0 : i32
    %c0_i32_0 = arith.constant 0 : i32
    %c0_i32_1 = arith.constant 0 : i32
    return %c0_i32, %c0_i32_0 : i32, i32
  }
  func.func @transform_4(%arg0: i32) -> (i32, i32) {
    %c0_i32 = arith.constant 0 : i32
    %c0_i32_0 = arith.constant 0 : i32
    %c0_i32_1 = arith.constant 0 : i32
    return %c0_i32, %c0_i32_0 : i32, i32
  }
  func.func @transform_5(%arg0: i32) -> (i32, i32) {
    %c0_i32 = arith.constant 0 : i32
    %c0_i32_0 = arith.constant 0 : i32
    %c0_i32_1 = arith.constant 0 : i32
    return %c0_i32, %c0_i32_0 : i32, i32
  }
  func.func @transform_6(%arg0: i32) -> (i32, i32) {
    %c0_i32 = arith.constant 0 : i32
    %c0_i32_0 = arith.constant 0 : i32
    %c0_i32_1 = arith.constant 0 : i32
    return %c0_i32, %c0_i32_0 : i32, i32
  }
  func.func @transform_7(%arg0: i32) -> (i32, i32) {
    %c0_i32 = arith.constant 0 : i32
    %c0_i32_0 = arith.constant 0 : i32
    return %c0_i32, %arg0 : i32, i32
  }
}

</mosaic_0001>

<llo_original>
// kernel: tpu_custom_call.1
$region0: #{tpu_custom_call.1}
  #allocation0 [shape = 'u32[]', space=smem, size = 0x4, offset = 0x4, fixed_abs, tag = 'smem constant byte address 0x4 - core index']
  #allocation1 [shape = 'u32[72,128]{1,0:T(1,128)}', space=vmem, size = 0x9000, scoped, tag = 'internal scratch']
  %s0 = inlined_call_operand.hbm [shape: f32[8,512], index: 0, kind: input, shape index: {}]
  %s1 = inlined_call_operand.vmem [shape: f32[8,72], index: 1, kind: input, shape index: {}]
  %s2 = inlined_call_operand.vmem [shape: f32[8,1], index: 2, kind: input, shape index: {}]
  %s3 = inlined_call_operand.vmem [shape: f32[8,72], index: 3, kind: input, shape index: {}]
  %s4 = inlined_call_operand.vmem [shape: f32[8,1], index: 4, kind: input, shape index: {}]
  %s5 = inlined_call_operand.hbm [shape: f32[9,512], index: 5, kind: input, shape index: {}]
  %s6 = inlined_call_operand.hbm [shape: f32[512,128], index: 6, kind: input, shape index: {}]
  %s7 = inlined_call_operand.hbm [shape: f32[8,128], index: 7, kind: output, shape index: {}]
  %s8 = sld [smem:[#allocation0]]
  $region50: #{tpu_custom_call.1} parent=0
    _
  %s10 = ssub.s32 1, %s8
  %s11 = scalar_select 0, %s10, %s8
  $region1: #{tpu_custom_call.1} parent=0
    #allocation2 [shape = 'u8[16384]{0}', space=vmem, size = 0x4000, scoped, tag = 'input window, operand 0, single buffered']
    #allocation3 [shape = 's32[1]{0}', space=sflag, size = 0x4, scoped, tag = 'scoped memory for tpu_custom_call.1']
    #allocation4 [shape = 's32[1]{0}', space=sflag, size = 0x4, scoped, tag = 'scoped memory for tpu_custom_call.1']
    #allocation5 [shape = 'u8[32768]{0}', space=vmem, size = 0x8000, scoped, tag = 'input window, operand 5, single buffered']
    #allocation6 [shape = 's32[1]{0}', space=sflag, size = 0x4, scoped, tag = 'scoped memory for tpu_custom_call.1']
    #allocation7 [shape = 'u8[262144]{0}', space=vmem, size = 0x40000, scoped, tag = 'input window, operand 6, single buffered']
    #allocation8 [shape = 'u8[4096]{0}', space=vmem, size = 0x1000, scoped, tag = 'output window, operand 0, single buffered']
    %12 = vsyncpa [#allocation3], 0
    %13 = vsyncpa [#allocation6], 0
    %14 = vsyncpa [#allocation4], 0
    // Predicated region
    $region2: #{tpu_custom_call.1} parent=1 // pred_check
      _
    $region3: #{tpu_custom_call.1} parent=1 // pred_check_branch
      %16 = sbr.rel (0) target = $region5
    $region4: #{tpu_custom_call.1} parent=1 // pred_region
      %18 = vsyncadd [#allocation3], 0
      %s20 = sshll.u32 %s0, 4
      %s21 = int_to_ptr.hbm [resolvable:$true] %s20
      %s22 = sshll.u32 [#allocation2], 4
      %s23 = int_to_ptr.vmem [resolvable:$true] %s22
      %25 = dma.hbm_to_vmem [thread:$0]  %s21, 512, %s23, [#allocation3]
    $region5: #{tpu_custom_call.1} parent=1 // pred_fallthru
      _
    // Predicated region
    $region6: #{tpu_custom_call.1} parent=1 // pred_check
      _
    $region7: #{tpu_custom_call.1} parent=1 // pred_check_branch
      %27 = sbr.rel (0) target = $region9
    $region8: #{tpu_custom_call.1} parent=1 // pred_region
      _
    $region9: #{tpu_custom_call.1} parent=1 // pred_fallthru
      _
    // Predicated region
    $region10: #{tpu_custom_call.1} parent=1 // pred_check
      _
    $region11: #{tpu_custom_call.1} parent=1 // pred_check_branch
      %29 = sbr.rel (0) target = $region13
    $region12: #{tpu_custom_call.1} parent=1 // pred_region
      _
    $region13: #{tpu_custom_call.1} parent=1 // pred_fallthru
      _
    // Predicated region
    $region14: #{tpu_custom_call.1} parent=1 // pred_check
      _
    $region15: #{tpu_custom_call.1} parent=1 // pred_check_branch
      %31 = sbr.rel (0) target = $region17
    $region16: #{tpu_custom_call.1} parent=1 // pred_region
      _
    $region17: #{tpu_custom_call.1} parent=1 // pred_fallthru
      _
    // Predicated region
    $region18: #{tpu_custom_call.1} parent=1 // pred_check
      _
    $region19: #{tpu_custom_call.1} parent=1 // pred_check_branch
      %33 = sbr.rel (0) target = $region21
    $region20: #{tpu_custom_call.1} parent=1 // pred_region
      _
    $region21: #{tpu_custom_call.1} parent=1 // pred_fallthru
      _
    // Predicated region
    $region22: #{tpu_custom_call.1} parent=1 // pred_check
      _
    $region23: #{tpu_custom_call.1} parent=1 // pred_check_branch
      %35 = sbr.rel (0) target = $region25
    $region24: #{tpu_custom_call.1} parent=1 // pred_region
      %37 = vsyncadd [#allocation6], 0
      %s38 = sshll.u32 %s5, 4
      %s39 = int_to_ptr.hbm [resolvable:$true] %s38
      %s40 = sshll.u32 [#allocation5], 4
      %s41 = int_to_ptr.vmem [resolvable:$true] %s40
      %46 = dma.hbm_to_vmem [thread:$0]  %s39, 1024, %s41, [#allocation6], 512, 512, 32
    $region25: #{tpu_custom_call.1} parent=1 // pred_fallthru
      _
    // Predicated region
    $region26: #{tpu_custom_call.1} parent=1 // pred_check
      _
    $region27: #{tpu_custom_call.1} parent=1 // pred_check_branch
      %48 = sbr.rel (0) target = $region29
    $region28: #{tpu_custom_call.1} parent=1 // pred_region
      %50 = vsyncadd [#allocation6], 0
      %s51 = sshll.u32 %s6, 4
      %s52 = int_to_ptr.hbm [resolvable:$true] %s51
      %s53 = sshll.u32 [#allocation7], 4
      %s54 = int_to_ptr.vmem [resolvable:$true] %s53
      %59 = dma.hbm_to_vmem [thread:$0]  %s52, 8192, %s54, [#allocation6], 128, 128, 8
    $region29: #{tpu_custom_call.1} parent=1 // pred_fallthru
      _
    // Predicated region
    $region30: #{tpu_custom_call.1} parent=1 // pred_check
      _
    $region31: #{tpu_custom_call.1} parent=1 // pred_check_branch
      %61 = sbr.rel (0) target = $region33
    $region32: #{tpu_custom_call.1} parent=1 // pred_region
      %63 = dma.done [#allocation3], 512
    $region33: #{tpu_custom_call.1} parent=1 // pred_fallthru
      _
    // Predicated region
    $region34: #{tpu_custom_call.1} parent=1 // pred_check
      _
    $region35: #{tpu_custom_call.1} parent=1 // pred_check_branch
      %65 = sbr.rel (0) target = $region37
    $region36: #{tpu_custom_call.1} parent=1 // pred_region
      %67 = dma.done [#allocation6], 1024
    $region37: #{tpu_custom_call.1} parent=1 // pred_fallthru
      _
    // Predicated region
    $region38: #{tpu_custom_call.1} parent=1 // pred_check
      _
    $region39: #{tpu_custom_call.1} parent=1 // pred_check_branch
      %69 = sbr.rel (0) target = $region41
    $region40: #{tpu_custom_call.1} parent=1 // pred_region
      %71 = dma.done [#allocation6], 8192
    $region41: #{tpu_custom_call.1} parent=1 // pred_fallthru
      _
    %v72 = vld [vmem:[#allocation5] sm:$0xff]
    %v73 = vld [vmem:[#allocation5 + $0x8] sm:$0xff]
    %v74 = vld [vmem:[#allocation5 + $0x10] sm:$0xff]
    %v75 = vld [vmem:[#allocation5 + $0x18] sm:$0xff]
    %v76 = vld [vmem:[#allocation5 + $0x20] sm:$0x1]
    %v77 = vld [vmem:[#allocation5 + $0x28] sm:$0x1]
    %v78 = vld [vmem:[#allocation5 + $0x30] sm:$0x1]
    %v79 = vld [vmem:[#allocation5 + $0x38] sm:$0x1]
    %v80 = vld [vmem:[#allocation2] sm:$0xff]
    %v81 = vld [vmem:[#allocation2 + $0x8] sm:$0xff]
    %v82 = vld [vmem:[#allocation2 + $0x10] sm:$0xff]
    %v83 = vld [vmem:[#allocation2 + $0x18] sm:$0xff]
    %84 = vrot.lane.b32.xlu0 %v80, 17
    %v85 = vpop.permute.xlu0 %84
    %86 = vrot.lane.b32.xlu0 %v81, 17
    %v87 = vpop.permute.xlu0 %86
    %88 = vrot.lane.b32.xlu0 %v82, 17
    %v89 = vpop.permute.xlu0 %88
    %90 = vrot.lane.b32.xlu0 %v83, 17
    %v91 = vpop.permute.xlu0 %90
    %v92 = vlaneseq
    %v93 = vand.u32 %v92, 127
    %vm94 = vcmp.lt.s32.totalorder %v93, 17
    %v95 = vsel %vm94, %v89, %v91
    %v96 = vsel %vm94, %v87, %v89
    %v97 = vsel %vm94, %v85, %v87
    %v98 = vsel %vm94, %v91, %v85
    %v99 = vperm.slane %v72, 0
    %v100 = vperm.slane %v73, 0
    %v101 = vperm.slane %v74, 0
    %v102 = vperm.slane %v75, 0
    %v103 = vmul.f32 %v98, %v99
    %v104 = vmul.f32 %v97, %v100
    %v105 = vmul.f32 %v96, %v101
    %v106 = vmul.f32 %v95, %v102
    %107 = vrot.lane.b32.xlu0 %v80, 16
    %v108 = vpop.permute.xlu0 %107
    %109 = vrot.lane.b32.xlu0 %v81, 16
    %v110 = vpop.permute.xlu0 %109
    %111 = vrot.lane.b32.xlu0 %v82, 16
    %v112 = vpop.permute.xlu0 %111
    %113 = vrot.lane.b32.xlu0 %v83, 16
    %v114 = vpop.permute.xlu0 %113
    %vm115 = vcmp.lt.s32.totalorder %v93, 16
    %v116 = vsel %vm115, %v112, %v114
    %v117 = vsel %vm115, %v110, %v112
    %v118 = vsel %vm115, %v108, %v110
    %v119 = vsel %vm115, %v114, %v108
    %v120 = vperm.slane %v72, 1
    %v121 = vperm.slane %v73, 1
    %v122 = vperm.slane %v74, 1
    %v123 = vperm.slane %v75, 1
    %v124 = vmul.f32 %v119, %v120
    %v125 = vmul.f32 %v118, %v121
    %v126 = vmul.f32 %v117, %v122
    %v127 = vmul.f32 %v116, %v123
    %128 = vrot.lane.b32.xlu0 %v80, 15
    %v129 = vpop.permute.xlu0 %128
    %130 = vrot.lane.b32.xlu0 %v81, 15
    %v131 = vpop.permute.xlu0 %130
    %132 = vrot.lane.b32.xlu0 %v82, 15
    %v133 = vpop.permute.xlu0 %132
    %134 = vrot.lane.b32.xlu0 %v83, 15
    %v135 = vpop.permute.xlu0 %134
    %vm136 = vcmp.lt.s32.totalorder %v93, 15
    %v137 = vsel %vm136, %v133, %v135
    %v138 = vsel %vm136, %v131, %v133
    %v139 = vsel %vm136, %v129, %v131
    %v140 = vsel %vm136, %v135, %v129
    %v141 = vperm.slane %v72, 2
    %v142 = vperm.slane %v73, 2
    %v143 = vperm.slane %v74, 2
    %v144 = vperm.slane %v75, 2
    %v145 = vmul.f32 %v140, %v141
    %v146 = vmul.f32 %v139, %v142
    %v147 = vmul.f32 %v138, %v143
    %v148 = vmul.f32 %v137, %v144
    %149 = vrot.lane.b32.xlu0 %v80, 1
    %v150 = vpop.permute.xlu0 %149
    %151 = vrot.lane.b32.xlu0 %v81, 1
    %v152 = vpop.permute.xlu0 %151
    %153 = vrot.lane.b32.xlu0 %v82, 1
    %v154 = vpop.permute.xlu0 %153
    %155 = vrot.lane.b32.xlu0 %v83, 1
    %v156 = vpop.permute.xlu0 %155
    %vm157 = vcmp.lt.s32.totalorder %v93, 1
    %v158 = vsel %vm157, %v154, %v156
    %v159 = vsel %vm157, %v152, %v154
    %v160 = vsel %vm157, %v150, %v152
    %v161 = vsel %vm157, %v156, %v150
    %v162 = vperm.slane %v72, 3
    %v163 = vperm.slane %v73, 3
    %v164 = vperm.slane %v74, 3
    %v165 = vperm.slane %v75, 3
    %v166 = vmul.f32 %v161, %v162
    %v167 = vmul.f32 %v160, %v163
    %v168 = vmul.f32 %v159, %v164
    %v169 = vmul.f32 %v158, %v165
    %170 = vrot.lane.b32.xlu0 %v80, 127
    %v171 = vpop.permute.xlu0 %170
    %172 = vrot.lane.b32.xlu0 %v81, 127
    %v173 = vpop.permute.xlu0 %172
    %174 = vrot.lane.b32.xlu0 %v82, 127
    %v175 = vpop.permute.xlu0 %174
    %176 = vrot.lane.b32.xlu0 %v83, 127
    %v177 = vpop.permute.xlu0 %176
    %vm178 = vcmp.lt.s32.totalorder %v93, 127
    %v179 = vsel %vm178, %v175, %v177
    %v180 = vsel %vm178, %v173, %v175
    %v181 = vsel %vm178, %v171, %v173
    %v182 = vsel %vm178, %v177, %v171
    %v183 = vperm.slane %v72, 5
    %v184 = vperm.slane %v73, 5
    %v185 = vperm.slane %v74, 5
    %v186 = vperm.slane %v75, 5
    %v187 = vmul.f32 %v181, %v183
    %v188 = vmul.f32 %v180, %v184
    %v189 = vmul.f32 %v179, %v185
    %v190 = vmul.f32 %v182, %v186
    %191 = vrot.lane.b32.xlu0 %v80, 113
    %v192 = vpop.permute.xlu0 %191
    %193 = vrot.lane.b32.xlu0 %v81, 113
    %v194 = vpop.permute.xlu0 %193
    %195 = vrot.lane.b32.xlu0 %v82, 113
    %v196 = vpop.permute.xlu0 %195
    %197 = vrot.lane.b32.xlu0 %v83, 113
    %v198 = vpop.permute.xlu0 %197
    %vm199 = vcmp.lt.s32.totalorder %v93, 113
    %v200 = vsel %vm199, %v196, %v198
    %v201 = vsel %vm199, %v194, %v196
    %v202 = vsel %vm199, %v192, %v194
    %v203 = vsel %vm199, %v198, %v192
    %v204 = vperm.slane %v72, 6
    %v205 = vperm.slane %v73, 6
    %v206 = vperm.slane %v74, 6
    %v207 = vperm.slane %v75, 6
    %v208 = vmul.f32 %v202, %v204
    %v209 = vmul.f32 %v201, %v205
    %v210 = vmul.f32 %v200, %v206
    %v211 = vmul.f32 %v203, %v207
    %212 = vrot.lane.b32.xlu0 %v80, 112
    %v213 = vpop.permute.xlu0 %212
    %214 = vrot.lane.b32.xlu0 %v81, 112
    %v215 = vpop.permute.xlu0 %214
    %216 = vrot.lane.b32.xlu0 %v82, 112
    %v217 = vpop.permute.xlu0 %216
    %218 = vrot.lane.b32.xlu0 %v83, 112
    %v219 = vpop.permute.xlu0 %218
    %vm220 = vcmp.lt.s32.totalorder %v93, 112
    %v221 = vsel %vm220, %v217, %v219
    %v222 = vsel %vm220, %v215, %v217
    %v223 = vsel %vm220, %v213, %v215
    %v224 = vsel %vm220, %v219, %v213
    %v225 = vperm.slane %v72, 7
    %v226 = vperm.slane %v73, 7
    %v227 = vperm.slane %v74, 7
    %v228 = vperm.slane %v75, 7
    %v229 = vmul.f32 %v223, %v225
    %v230 = vmul.f32 %v222, %v226
    %v231 = vmul.f32 %v221, %v227
    %v232 = vmul.f32 %v224, %v228
    %233 = vrot.lane.b32.xlu0 %v80, 111
    %v234 = vpop.permute.xlu0 %233
    %235 = vrot.lane.b32.xlu0 %v81, 111
    %v236 = vpop.permute.xlu0 %235
    %237 = vrot.lane.b32.xlu0 %v82, 111
    %v238 = vpop.permute.xlu0 %237
    %239 = vrot.lane.b32.xlu0 %v83, 111
    %v240 = vpop.permute.xlu0 %239
    %vm241 = vcmp.lt.s32.totalorder %v93, 111
    %v242 = vsel %vm241, %v238, %v240
    %v243 = vsel %vm241, %v236, %v238
    %v244 = vsel %vm241, %v234, %v236
    %v245 = vsel %vm241, %v240, %v234
    %v246 = vperm.slane %v76, 0
    %v247 = vperm.slane %v77, 0
    %v248 = vperm.slane %v78, 0
    %v249 = vperm.slane %v79, 0
    %v250 = vmul.f32 %v244, %v246
    %v251 = vmul.f32 %v243, %v247
    %v252 = vmul.f32 %v242, %v248
    %v253 = vmul.f32 %v245, %v249
    %v254 = vld [vmem:[%s1] sm:$0xff]
    %v255 = vld [vmem:[%s2] sm:$0xff]
    %257 = vset.pattern.permute.xlu0 0
    %258 = vperm.xlu0 %257, %v255
    %v259 = vpop.permute.xlu0 %258
    %vm261 = vcmask 588800
    %v263 = vsel %vm261, %v254, 0
    %265 = vmatpush.msra.mxu0 0.0
    %266 = vmatpush.msra.mxu0 0.0
    %267 = vmatpush.msra.mxu0 0.0
    %268 = vmatpush.msra.mxu0 0.0
    %269 = vmatpush.msra.mxu0 0.0
    %270 = vmatpush.msra.mxu0 0.0
    %271 = vmatpush.msra.mxu0 0.0
    %272 = vmatpush.msra.mxu0 %v250
    %273 = vmatpush.msra.mxu0 %v229
    %274 = vmatpush.msra.mxu0 %v208
    %275 = vmatpush.msra.mxu0 %v187
    %276 = vmatpush.msra.mxu0 %v80
    %277 = vmatpush.msra.mxu0 %v166
    %278 = vmatpush.msra.mxu0 %v145
    %279 = vmatpush.msra.mxu0 %v124
    %280 = vmatpush.msra.mxu0 %v103
    %281 = vmatmul.f32.gmra.mxu0 %v263
    %v282 = vpop.f32.mrf.mxu0
    %v283 = vadd.f32 %v259, %v282
    %284 = vdwg.mxu0
    %285 = vmatpush.msra.mxu0 0.0
    %286 = vmatpush.msra.mxu0 0.0
    %287 = vmatpush.msra.mxu0 0.0
    %288 = vmatpush.msra.mxu0 0.0
    %289 = vmatpush.msra.mxu0 0.0
    %290 = vmatpush.msra.mxu0 0.0
    %291 = vmatpush.msra.mxu0 0.0
    %292 = vmatpush.msra.mxu0 %v251
    %293 = vmatpush.msra.mxu0 %v230
    %294 = vmatpush.msra.mxu0 %v209
    %295 = vmatpush.msra.mxu0 %v188
    %296 = vmatpush.msra.mxu0 %v81
    %297 = vmatpush.msra.mxu0 %v167
    %298 = vmatpush.msra.mxu0 %v146
    %299 = vmatpush.msra.mxu0 %v125
    %300 = vmatpush.msra.mxu0 %v104
    %301 = vmatmul.f32.gmra.mxu0 %v263
    %v302 = vpop.f32.mrf.mxu0
    %v303 = vadd.f32 %v259, %v302
    %304 = vdwg.mxu0
    %305 = vmatpush.msra.mxu0 0.0
    %306 = vmatpush.msra.mxu0 0.0
    %307 = vmatpush.msra.mxu0 0.0
    %308 = vmatpush.msra.mxu0 0.0
    %309 = vmatpush.msra.mxu0 0.0
    %310 = vmatpush.msra.mxu0 0.0
    %311 = vmatpush.msra.mxu0 0.0
    %312 = vmatpush.msra.mxu0 %v252
    %313 = vmatpush.msra.mxu0 %v231
    %314 = vmatpush.msra.mxu0 %v210
    %315 = vmatpush.msra.mxu0 %v189
    %316 = vmatpush.msra.mxu0 %v82
    %317 = vmatpush.msra.mxu0 %v168
    %318 = vmatpush.msra.mxu0 %v147
    %319 = vmatpush.msra.mxu0 %v126
    %320 = vmatpush.msra.mxu0 %v105
    %321 = vmatmul.f32.gmra.mxu0 %v263
    %v322 = vpop.f32.mrf.mxu0
    %v323 = vadd.f32 %v259, %v322
    %324 = vdwg.mxu0
    %325 = vmatpush.msra.mxu0 0.0
    %326 = vmatpush.msra.mxu0 0.0
    %327 = vmatpush.msra.mxu0 0.0
    %328 = vmatpush.msra.mxu0 0.0
    %329 = vmatpush.msra.mxu0 0.0
    %330 = vmatpush.msra.mxu0 0.0
    %331 = vmatpush.msra.mxu0 0.0
    %332 = vmatpush.msra.mxu0 %v253
    %333 = vmatpush.msra.mxu0 %v232
    %334 = vmatpush.msra.mxu0 %v211
    %335 = vmatpush.msra.mxu0 %v190
    %336 = vmatpush.msra.mxu0 %v83
    %337 = vmatpush.msra.mxu0 %v169
    %338 = vmatpush.msra.mxu0 %v148
    %339 = vmatpush.msra.mxu0 %v127
    %340 = vmatpush.msra.mxu0 %v106
    %341 = vmatmul.f32.gmra.mxu0 %v263
    %v342 = vpop.f32.mrf.mxu0
    %v343 = vadd.f32 %v259, %v342
    %344 = vdwg.mxu0
    %v345 = vmax.f32 %v283, 0.0
    %v346 = vmax.f32 %v303, 0.0
    %v347 = vmax.f32 %v323, 0.0
    %v348 = vmax.f32 %v343, 0.0
    %349 = vrot.lane.b32.xlu0 %v345, 17
    %v350 = vpop.permute.xlu0 %349
    %351 = vrot.lane.b32.xlu0 %v346, 17
    %v352 = vpop.permute.xlu0 %351
    %353 = vrot.lane.b32.xlu0 %v347, 17
    %v354 = vpop.permute.xlu0 %353
    %355 = vrot.lane.b32.xlu0 %v348, 17
    %v356 = vpop.permute.xlu0 %355
    %v357 = vsel %vm94, %v354, %v356
    %v358 = vsel %vm94, %v352, %v354
    %v359 = vsel %vm94, %v350, %v352
    %v360 = vsel %vm94, %v356, %v350
    %v361 = vmul.f32 %v360, %v99
    %v362 = vmul.f32 %v359, %v100
    %v363 = vmul.f32 %v358, %v101
    %v364 = vmul.f32 %v357, %v102
    %365 = vrot.lane.b32.xlu0 %v345, 16
    %v366 = vpop.permute.xlu0 %365
    %367 = vrot.lane.b32.xlu0 %v346, 16
    %v368 = vpop.permute.xlu0 %367
    %369 = vrot.lane.b32.xlu0 %v347, 16
    %v370 = vpop.permute.xlu0 %369
    %371 = vrot.lane.b32.xlu0 %v348, 16
    %v372 = vpop.permute.xlu0 %371
    %v373 = vsel %vm115, %v370, %v372
    %v374 = vsel %vm115, %v368, %v370
    %v375 = vsel %vm115, %v366, %v368
    %v376 = vsel %vm115, %v372, %v366
    %v377 = vmul.f32 %v376, %v120
    %v378 = vmul.f32 %v375, %v121
    %v379 = vmul.f32 %v374, %v122
    %v380 = vmul.f32 %v373, %v123
    %381 = vrot.lane.b32.xlu0 %v345, 15
    %v382 = vpop.permute.xlu0 %381
    %383 = vrot.lane.b32.xlu0 %v346, 15
    %v384 = vpop.permute.xlu0 %383
    %385 = vrot.lane.b32.xlu0 %v347, 15
    %v386 = vpop.permute.xlu0 %385
    %387 = vrot.lane.b32.xlu0 %v348, 15
    %v388 = vpop.permute.xlu0 %387
    %v389 = vsel %vm136, %v386, %v388
    %v390 = vsel %vm136, %v384, %v386
    %v391 = vsel %vm136, %v382, %v384
    %v392 = vsel %vm136, %v388, %v382
    %v393 = vmul.f32 %v392, %v141
    %v394 = vmul.f32 %v391, %v142
    %v395 = vmul.f32 %v390, %v143
    %v396 = vmul.f32 %v389, %v144
    %397 = vrot.lane.b32.xlu0 %v345, 1
    %v398 = vpop.permute.xlu0 %397
    %399 = vrot.lane.b32.xlu0 %v346, 1
    %v400 = vpop.permute.xlu0 %399
    %401 = vrot.lane.b32.xlu0 %v347, 1
    %v402 = vpop.permute.xlu0 %401
    %403 = vrot.lane.b32.xlu0 %v348, 1
    %v404 = vpop.permute.xlu0 %403
    %v405 = vsel %vm157, %v402, %v404
    %v406 = vsel %vm157, %v400, %v402
    %v407 = vsel %vm157, %v398, %v400
    %v408 = vsel %vm157, %v404, %v398
    %v409 = vmul.f32 %v408, %v162
    %v410 = vmul.f32 %v407, %v163
    %v411 = vmul.f32 %v406, %v164
    %v412 = vmul.f32 %v405, %v165
    %413 = vrot.lane.b32.xlu0 %v345, 127
    %v414 = vpop.permute.xlu0 %413
    %415 = vrot.lane.b32.xlu0 %v346, 127
    %v416 = vpop.permute.xlu0 %415
    %417 = vrot.lane.b32.xlu0 %v347, 127
    %v418 = vpop.permute.xlu0 %417
    %419 = vrot.lane.b32.xlu0 %v348, 127
    %v420 = vpop.permute.xlu0 %419
    %v421 = vsel %vm178, %v418, %v420
    %v422 = vsel %vm178, %v416, %v418
    %v423 = vsel %vm178, %v414, %v416
    %v424 = vsel %vm178, %v420, %v414
    %v425 = vmul.f32 %v423, %v183
    %v426 = vmul.f32 %v422, %v184
    %v427 = vmul.f32 %v421, %v185
    %v428 = vmul.f32 %v424, %v186
    %429 = vrot.lane.b32.xlu0 %v345, 113
    %v430 = vpop.permute.xlu0 %429
    %431 = vrot.lane.b32.xlu0 %v346, 113
    %v432 = vpop.permute.xlu0 %431
    %433 = vrot.lane.b32.xlu0 %v347, 113
    %v434 = vpop.permute.xlu0 %433
    %435 = vrot.lane.b32.xlu0 %v348, 113
    %v436 = vpop.permute.xlu0 %435
    %v437 = vsel %vm199, %v434, %v436
    %v438 = vsel %vm199, %v432, %v434
    %v439 = vsel %vm199, %v430, %v432
    %v440 = vsel %vm199, %v436, %v430
    %v441 = vmul.f32 %v439, %v204
    %v442 = vmul.f32 %v438, %v205
    %v443 = vmul.f32 %v437, %v206
    %v444 = vmul.f32 %v440, %v207
    %445 = vrot.lane.b32.xlu0 %v345, 112
    %v446 = vpop.permute.xlu0 %445
    %447 = vrot.lane.b32.xlu0 %v346, 112
    %v448 = vpop.permute.xlu0 %447
    %449 = vrot.lane.b32.xlu0 %v347, 112
    %v450 = vpop.permute.xlu0 %449
    %451 = vrot.lane.b32.xlu0 %v348, 112
    %v452 = vpop.permute.xlu0 %451
    %v453 = vsel %vm220, %v450, %v452
    %v454 = vsel %vm220, %v448, %v450
    %v455 = vsel %vm220, %v446, %v448
    %v456 = vsel %vm220, %v452, %v446
    %v457 = vmul.f32 %v455, %v225
    %v458 = vmul.f32 %v454, %v226
    %v459 = vmul.f32 %v453, %v227
    %v460 = vmul.f32 %v456, %v228
    %461 = vrot.lane.b32.xlu0 %v345, 111
    %v462 = vpop.permute.xlu0 %461
    %463 = vrot.lane.b32.xlu0 %v346, 111
    %v464 = vpop.permute.xlu0 %463
    %465 = vrot.lane.b32.xlu0 %v347, 111
    %v466 = vpop.permute.xlu0 %465
    %467 = vrot.lane.b32.xlu0 %v348, 111
    %v468 = vpop.permute.xlu0 %467
    %v469 = vsel %vm241, %v466, %v468
    %v470 = vsel %vm241, %v464, %v466
    %v471 = vsel %vm241, %v462, %v464
    %v472 = vsel %vm241, %v468, %v462
    %v473 = vmul.f32 %v471, %v246
    %v474 = vmul.f32 %v470, %v247
    %v475 = vmul.f32 %v469, %v248
    %v476 = vmul.f32 %v472, %v249
    %v477 = vld [vmem:[%s3] sm:$0xff]
    %v478 = vld [vmem:[%s4] sm:$0xff]
    %480 = vset.pattern.permute.xlu0 0
    %481 = vperm.xlu0 %480, %v478
    %v482 = vpop.permute.xlu0 %481
    %v485 = vsel %vm261, %v477, 0
    %487 = vmatpush.msra.mxu0 0.0
    %488 = vmatpush.msra.mxu0 0.0
    %489 = vmatpush.msra.mxu0 0.0
    %490 = vmatpush.msra.mxu0 0.0
    %491 = vmatpush.msra.mxu0 0.0
    %492 = vmatpush.msra.mxu0 0.0
    %493 = vmatpush.msra.mxu0 0.0
    %494 = vmatpush.msra.mxu0 %v473
    %495 = vmatpush.msra.mxu0 %v457
    %496 = vmatpush.msra.mxu0 %v441
    %497 = vmatpush.msra.mxu0 %v425
    %498 = vmatpush.msra.mxu0 %v345
    %499 = vmatpush.msra.mxu0 %v409
    %500 = vmatpush.msra.mxu0 %v393
    %501 = vmatpush.msra.mxu0 %v377
    %502 = vmatpush.msra.mxu0 %v361
    %503 = vmatmul.f32.gmra.mxu0 %v485
    %v504 = vpop.f32.mrf.mxu0
    %v505 = vadd.f32 %v482, %v504
    %506 = vdwg.mxu0
    %507 = vmatpush.msra.mxu0 0.0
    %508 = vmatpush.msra.mxu0 0.0
    %509 = vmatpush.msra.mxu0 0.0
    %510 = vmatpush.msra.mxu0 0.0
    %511 = vmatpush.msra.mxu0 0.0
    %512 = vmatpush.msra.mxu0 0.0
    %513 = vmatpush.msra.mxu0 0.0
    %514 = vmatpush.msra.mxu0 %v474
    %515 = vmatpush.msra.mxu0 %v458
    %516 = vmatpush.msra.mxu0 %v442
    %517 = vmatpush.msra.mxu0 %v426
    %518 = vmatpush.msra.mxu0 %v346
    %519 = vmatpush.msra.mxu0 %v410
    %520 = vmatpush.msra.mxu0 %v394
    %521 = vmatpush.msra.mxu0 %v378
    %522 = vmatpush.msra.mxu0 %v362
    %523 = vmatmul.f32.gmra.mxu0 %v485
    %v524 = vpop.f32.mrf.mxu0
    %v525 = vadd.f32 %v482, %v524
    %526 = vdwg.mxu0
    %527 = vmatpush.msra.mxu0 0.0
    %528 = vmatpush.msra.mxu0 0.0
    %529 = vmatpush.msra.mxu0 0.0
    %530 = vmatpush.msra.mxu0 0.0
    %531 = vmatpush.msra.mxu0 0.0
    %532 = vmatpush.msra.mxu0 0.0
    %533 = vmatpush.msra.mxu0 0.0
    %534 = vmatpush.msra.mxu0 %v475
    %535 = vmatpush.msra.mxu0 %v459
    %536 = vmatpush.msra.mxu0 %v443
    %537 = vmatpush.msra.mxu0 %v427
    %538 = vmatpush.msra.mxu0 %v347
    %539 = vmatpush.msra.mxu0 %v411
    %540 = vmatpush.msra.mxu0 %v395
    %541 = vmatpush.msra.mxu0 %v379
    %542 = vmatpush.msra.mxu0 %v363
    %543 = vmatmul.f32.gmra.mxu0 %v485
    %v544 = vpop.f32.mrf.mxu0
    %v545 = vadd.f32 %v482, %v544
    %546 = vdwg.mxu0
    %547 = vmatpush.msra.mxu0 0.0
    %548 = vmatpush.msra.mxu0 0.0
    %549 = vmatpush.msra.mxu0 0.0
    %550 = vmatpush.msra.mxu0 0.0
    %551 = vmatpush.msra.mxu0 0.0
    %552 = vmatpush.msra.mxu0 0.0
    %553 = vmatpush.msra.mxu0 0.0
    %554 = vmatpush.msra.mxu0 %v476
    %555 = vmatpush.msra.mxu0 %v460
    %556 = vmatpush.msra.mxu0 %v444
    %557 = vmatpush.msra.mxu0 %v428
    %558 = vmatpush.msra.mxu0 %v348
    %559 = vmatpush.msra.mxu0 %v412
    %560 = vmatpush.msra.mxu0 %v396
    %561 = vmatpush.msra.mxu0 %v380
    %562 = vmatpush.msra.mxu0 %v364
    %563 = vmatmul.f32.gmra.mxu0 %v485
    %v564 = vpop.f32.mrf.mxu0
    %v565 = vadd.f32 %v482, %v564
    %566 = vdwg.mxu0
    %v567 = vmax.f32 %v505, 0.0
    %v568 = vmax.f32 %v525, 0.0
    %v569 = vmax.f32 %v545, 0.0
    %v570 = vmax.f32 %v565, 0.0
    %571 = vrot.lane.b32.xlu0 %v567, 127
    %v572 = vpop.permute.xlu0 %571
    %573 = vrot.lane.b32.xlu0 %v568, 127
    %v574 = vpop.permute.xlu0 %573
    %575 = vrot.lane.b32.xlu0 %v569, 127
    %v576 = vpop.permute.xlu0 %575
    %577 = vrot.lane.b32.xlu0 %v570, 127
    %v578 = vpop.permute.xlu0 %577
    %v579 = vsel %vm178, %v576, %v578
    %v580 = vsel %vm178, %v574, %v576
    %v581 = vsel %vm178, %v572, %v574
    %v582 = vsel %vm178, %v578, %v572
    %v583 = vmax.f32 %v567, %v581
    %v584 = vmax.f32 %v568, %v580
    %v585 = vmax.f32 %v569, %v579
    %v586 = vmax.f32 %v570, %v582
    %587 = vrot.lane.b32.xlu0 %v583, 112
    %v588 = vpop.permute.xlu0 %587
    %589 = vrot.lane.b32.xlu0 %v584, 112
    %v590 = vpop.permute.xlu0 %589
    %591 = vrot.lane.b32.xlu0 %v585, 112
    %v592 = vpop.permute.xlu0 %591
    %593 = vrot.lane.b32.xlu0 %v586, 112
    %v594 = vpop.permute.xlu0 %593
    %v595 = vsel %vm220, %v592, %v594
    %v596 = vsel %vm220, %v590, %v592
    %v597 = vsel %vm220, %v588, %v590
    %v598 = vsel %vm220, %v594, %v588
    %v599 = vmax.f32 %v583, %v597
    %v600 = vmax.f32 %v584, %v596
    %v601 = vmax.f32 %v585, %v595
    %v602 = vmax.f32 %v586, %v598
    %v603 = vld [vmem:[#allocation7] sm:$0xff]
    %v604 = vld [vmem:[#allocation7 + $0x8] sm:$0xff]
    %v605 = vld [vmem:[#allocation7 + $0x10] sm:$0xff]
    %v606 = vld [vmem:[#allocation7 + $0x18] sm:$0xff]
    %v607 = vld [vmem:[#allocation7 + $0x20] sm:$0xff]
    %v608 = vld [vmem:[#allocation7 + $0x28] sm:$0xff]
    %v609 = vld [vmem:[#allocation7 + $0x30] sm:$0xff]
    %v610 = vld [vmem:[#allocation7 + $0x38] sm:$0xff]
    %v611 = vld [vmem:[#allocation7 + $0x40] sm:$0xff]
    %v612 = vld [vmem:[#allocation7 + $0x48] sm:$0xff]
    %v613 = vld [vmem:[#allocation7 + $0x50] sm:$0xff]
    %v614 = vld [vmem:[#allocation7 + $0x58] sm:$0xff]
    %v615 = vld [vmem:[#allocation7 + $0x60] sm:$0xff]
    %v616 = vld [vmem:[#allocation7 + $0x68] sm:$0xff]
    %v617 = vld [vmem:[#allocation7 + $0x70] sm:$0xff]
    %v618 = vld [vmem:[#allocation7 + $0x78] sm:$0xff]
    %v619 = vld [vmem:[#allocation7 + $0x80] sm:$0xff]
    %v620 = vld [vmem:[#allocation7 + $0x88] sm:$0xff]
    %v621 = vld [vmem:[#allocation7 + $0x90] sm:$0xff]
    %v622 = vld [vmem:[#allocation7 + $0x98] sm:$0xff]
    %v623 = vld [vmem:[#allocation7 + $0xa0] sm:$0xff]
    %v624 = vld [vmem:[#allocation7 + $0xa8] sm:$0xff]
    %v625 = vld [vmem:[#allocation7 + $0xb0] sm:$0xff]
    %v626 = vld [vmem:[#allocation7 + $0xb8] sm:$0xff]
    %v627 = vld [vmem:[#allocation7 + $0xc0] sm:$0xff]
    %v628 = vld [vmem:[#allocation7 + $0xc8] sm:$0xff]
    %v629 = vld [vmem:[#allocation7 + $0xd0] sm:$0xff]
    %v630 = vld [vmem:[#allocation7 + $0xd8] sm:$0xff]
    %v631 = vld [vmem:[#allocation7 + $0xe0] sm:$0xff]
    %v632 = vld [vmem:[#allocation7 + $0xe8] sm:$0xff]
    %v633 = vld [vmem:[#allocation7 + $0xf0] sm:$0xff]
    %v634 = vld [vmem:[#allocation7 + $0xf8] sm:$0xff]
    %v635 = vld [vmem:[#allocation7 + $0x100] sm:$0xff]
    %v636 = vld [vmem:[#allocation7 + $0x108] sm:$0xff]
    %v637 = vld [vmem:[#allocation7 + $0x110] sm:$0xff]
    %v638 = vld [vmem:[#allocation7 + $0x118] sm:$0xff]
    %v639 = vld [vmem:[#allocation7 + $0x120] sm:$0xff]
    %v640 = vld [vmem:[#allocation7 + $0x128] sm:$0xff]
    %v641 = vld [vmem:[#allocation7 + $0x130] sm:$0xff]
    %v642 = vld [vmem:[#allocation7 + $0x138] sm:$0xff]
    %v643 = vld [vmem:[#allocation7 + $0x140] sm:$0xff]
    %v644 = vld [vmem:[#allocation7 + $0x148] sm:$0xff]
    %v645 = vld [vmem:[#allocation7 + $0x150] sm:$0xff]
    %v646 = vld [vmem:[#allocation7 + $0x158] sm:$0xff]
    %v647 = vld [vmem:[#allocation7 + $0x160] sm:$0xff]
    %v648 = vld [vmem:[#allocation7 + $0x168] sm:$0xff]
    %v649 = vld [vmem:[#allocation7 + $0x170] sm:$0xff]
    %v650 = vld [vmem:[#allocation7 + $0x178] sm:$0xff]
    %v651 = vld [vmem:[#allocation7 + $0x180] sm:$0xff]
    %v652 = vld [vmem:[#allocation7 + $0x188] sm:$0xff]
    %v653 = vld [vmem:[#allocation7 + $0x190] sm:$0xff]
    %v654 = vld [vmem:[#allocation7 + $0x198] sm:$0xff]
    %v655 = vld [vmem:[#allocation7 + $0x1a0] sm:$0xff]
    %v656 = vld [vmem:[#allocation7 + $0x1a8] sm:$0xff]
    %v657 = vld [vmem:[#allocation7 + $0x1b0] sm:$0xff]
    %v658 = vld [vmem:[#allocation7 + $0x1b8] sm:$0xff]
    %v659 = vld [vmem:[#allocation7 + $0x1c0] sm:$0xff]
    %v660 = vld [vmem:[#allocation7 + $0x1c8] sm:$0xff]
    %v661 = vld [vmem:[#allocation7 + $0x1d0] sm:$0xff]
    %v662 = vld [vmem:[#allocation7 + $0x1d8] sm:$0xff]
    %v663 = vld [vmem:[#allocation7 + $0x1e0] sm:$0xff]
    %v664 = vld [vmem:[#allocation7 + $0x1e8] sm:$0xff]
    %v665 = vld [vmem:[#allocation7 + $0x1f0] sm:$0xff]
    %v666 = vld [vmem:[#allocation7 + $0x1f8] sm:$0xff]
    %667 = vmatpush.msra.mxu0 %v618
    %668 = vmatpush.msra.mxu0 %v617
    %669 = vmatpush.msra.mxu0 %v616
    %670 = vmatpush.msra.mxu0 %v615
    %671 = vmatpush.msra.mxu0 %v614
    %672 = vmatpush.msra.mxu0 %v613
    %673 = vmatpush.msra.mxu0 %v612
    %674 = vmatpush.msra.mxu0 %v611
    %675 = vmatpush.msra.mxu0 %v610
    %676 = vmatpush.msra.mxu0 %v609
    %677 = vmatpush.msra.mxu0 %v608
    %678 = vmatpush.msra.mxu0 %v607
    %679 = vmatpush.msra.mxu0 %v606
    %680 = vmatpush.msra.mxu0 %v605
    %681 = vmatpush.msra.mxu0 %v604
    %682 = vmatpush.msra.mxu0 %v603
    %683 = vmatmul.f32.gmra.mxu0 %v599
    %v684 = vpop.f32.mrf.mxu0
    %v685 = vadd.f32 0.0, %v684
    %686 = vdwg.mxu0
    %687 = vmatpush.msra.mxu0 %v634
    %688 = vmatpush.msra.mxu0 %v633
    %689 = vmatpush.msra.mxu0 %v632
    %690 = vmatpush.msra.mxu0 %v631
    %691 = vmatpush.msra.mxu0 %v630
    %692 = vmatpush.msra.mxu0 %v629
    %693 = vmatpush.msra.mxu0 %v628
    %694 = vmatpush.msra.mxu0 %v627
    %695 = vmatpush.msra.mxu0 %v626
    %696 = vmatpush.msra.mxu0 %v625
    %697 = vmatpush.msra.mxu0 %v624
    %698 = vmatpush.msra.mxu0 %v623
    %699 = vmatpush.msra.mxu0 %v622
    %700 = vmatpush.msra.mxu0 %v621
    %701 = vmatpush.msra.mxu0 %v620
    %702 = vmatpush.msra.mxu0 %v619
    %703 = vmatmul.f32.gmra.mxu0 %v600
    %v704 = vpop.f32.mrf.mxu0
    %v705 = vadd.f32 %v685, %v704
    %706 = vdwg.mxu0
    %707 = vmatpush.msra.mxu0 %v650
    %708 = vmatpush.msra.mxu0 %v649
    %709 = vmatpush.msra.mxu0 %v648
    %710 = vmatpush.msra.mxu0 %v647
    %711 = vmatpush.msra.mxu0 %v646
    %712 = vmatpush.msra.mxu0 %v645
    %713 = vmatpush.msra.mxu0 %v644
    %714 = vmatpush.msra.mxu0 %v643
    %715 = vmatpush.msra.mxu0 %v642
    %716 = vmatpush.msra.mxu0 %v641
    %717 = vmatpush.msra.mxu0 %v640
    %718 = vmatpush.msra.mxu0 %v639
    %719 = vmatpush.msra.mxu0 %v638
    %720 = vmatpush.msra.mxu0 %v637
    %721 = vmatpush.msra.mxu0 %v636
    %722 = vmatpush.msra.mxu0 %v635
    %723 = vmatmul.f32.gmra.mxu0 %v601
    %v724 = vpop.f32.mrf.mxu0
    %v725 = vadd.f32 %v705, %v724
    %726 = vdwg.mxu0
    %727 = vmatpush.msra.mxu0 %v666
    %728 = vmatpush.msra.mxu0 %v665
    %729 = vmatpush.msra.mxu0 %v664
    %730 = vmatpush.msra.mxu0 %v663
    %731 = vmatpush.msra.mxu0 %v662
    %732 = vmatpush.msra.mxu0 %v661
    %733 = vmatpush.msra.mxu0 %v660
    %734 = vmatpush.msra.mxu0 %v659
    %735 = vmatpush.msra.mxu0 %v658
    %736 = vmatpush.msra.mxu0 %v657
    %737 = vmatpush.msra.mxu0 %v656
    %738 = vmatpush.msra.mxu0 %v655
    %739 = vmatpush.msra.mxu0 %v654
    %740 = vmatpush.msra.mxu0 %v653
    %741 = vmatpush.msra.mxu0 %v652
    %742 = vmatpush.msra.mxu0 %v651
    %743 = vmatmul.f32.gmra.mxu0 %v602
    %v744 = vpop.f32.mrf.mxu0
    %v745 = vadd.f32 %v725, %v744
    %746 = vdwg.mxu0
    %747 = vst [vmem:[#allocation8] sm:$0xff] %v745
    // Predicated region
    $region42: #{tpu_custom_call.1} parent=1 // pred_check
      _
    $region43: #{tpu_custom_call.1} parent=1 // pred_check_branch
      %749 = sbr.rel (0) target = $region45
    $region44: #{tpu_custom_call.1} parent=1 // pred_region
      %751 = vsyncadd [#allocation4], 0
      %s753 = sshll.u32 [#allocation8], 4
      %s754 = int_to_ptr.vmem [resolvable:$true] %s753
      %s755 = sshll.u32 %s7, 4
      %s756 = int_to_ptr.hbm [resolvable:$true] %s755
      %758 = dma.vmem_to_hbm [thread:$0]  %s754, 128, %s756, [#allocation4]
    $region45: #{tpu_custom_call.1} parent=1 // pred_fallthru
      _
    // Predicated region
    $region46: #{tpu_custom_call.1} parent=1 // pred_check
      _
    $region47: #{tpu_custom_call.1} parent=1 // pred_check_branch
      %760 = sbr.rel (0) target = $region49
    $region48: #{tpu_custom_call.1} parent=1 // pred_region
      %762 = dma.done [#allocation4], 128
    $region49: #{tpu_custom_call.1} parent=1 // pred_fallthru
      _
    %763 = vsyncpa [#allocation3], 1
    %764 = vsyncpa [#allocation6], 1
    %765 = vsyncpa [#allocation4], 1

</llo_original>
